<compile_context>
chip_gen: v6e
topology: v6e:2x2x1
jax: 0.10.0
libtpu: 0.0.40
codegen_flags: <defaults>
</compile_context>

<pallas_src>
import math

import jax
import jax.numpy as jnp
from jax.experimental import pallas as pl
from jax.experimental.pallas import tpu as pltpu


def _round_up(n, m):
    return ((n + m - 1) // m) * m


def _net3_kernel(x_ref,
                 w1_ref, b1_ref,
                 w2_ref, b2_ref,
                 w3_ref, b3_ref,
                 w4_ref, b4_ref,
                 o_ref):
    cdt = w1_ref.dtype  # MXU compute dtype (f32 or bf16); accumulation is f32.
    # layer 1: relu(x @ W1 + b1)
    h = jnp.dot(x_ref[...].astype(cdt), w1_ref[...],
                preferred_element_type=jnp.float32)
    h = jnp.maximum(h + b1_ref[...], 0.0)
    # layer 2: relu(h @ W2 + b2)
    h = jnp.dot(h.astype(cdt), w2_ref[...], preferred_element_type=jnp.float32)
    h = jnp.maximum(h + b2_ref[...], 0.0)
    # layer 3: relu(h @ W3 + b3)
    h = jnp.dot(h.astype(cdt), w3_ref[...], preferred_element_type=jnp.float32)
    h = jnp.maximum(h + b3_ref[...], 0.0)
    # output layer: h @ W4 + b4 (no activation); lane-dense (padded to 128)
    out = jnp.dot(h.astype(cdt), w4_ref[...], preferred_element_type=jnp.float32)
    o_ref[...] = (out + b4_ref[...]).astype(o_ref.dtype)


def net3_forward(x, params, *, compute_dtype=jnp.bfloat16, block_m=128):
    """x: [B, feature]; params: dict of pre-transposed weights / row biases.

    block_m: batch tile. 128 is fine for these layer widths on all of
    v5e/v6e/v7x (tiles are tiny); raise it for large-batch streaming, and
    halve whatever you pick for v6e when targeting v7x (64 MiB VMEM).
    """
    B, F = x.shape
    H = params["w1"].shape[1]
    OUT = params["w4"].shape[1]
    OUT_PAD = _round_up(OUT, 128)  # lane-dense output slab (no masked stores)

    TM = min(block_m, _round_up(B, 8))
    B_pad = _round_up(B, TM)

    # Prepare streamed input (pad batch to a multiple of the tile).
    x_p = x.astype(compute_dtype)
    if B_pad != B:
        x_p = jnp.pad(x_p, ((0, B_pad - B), (0, 0)))

    # Weights in the MXU compute dtype; biases stay f32 (added to f32 accs).
    w1 = params["w1"].astype(compute_dtype)
    w2 = params["w2"].astype(compute_dtype)
    w3 = params["w3"].astype(compute_dtype)
    w4 = jnp.pad(params["w4"], ((0, 0), (0, OUT_PAD - OUT))).astype(compute_dtype)
    b1 = params["b1"].astype(jnp.float32)
    b2 = params["b2"].astype(jnp.float32)
    b3 = params["b3"].astype(jnp.float32)
    b4 = jnp.pad(params["b4"], ((0, 0), (0, OUT_PAD - OUT))).astype(jnp.float32)

    grid = (B_pad // TM,)
    const = lambda i: (0, 0)  # weights/biases: same block every step -> resident

    # Advisory cost estimate for XLA's scheduler.
    x_bytes = x_p.size * x_p.dtype.itemsize
    w_bytes = sum(int(a.size) * a.dtype.itemsize
                  for a in (w1, w2, w3, w4, b1, b2, b3, b4))
    out_bytes = B_pad * OUT_PAD * 4
    flops = 2 * B_pad * (F * H + H * H + H * H + H * OUT_PAD)

    out = pl.pallas_call(
        _net3_kernel,
        out_shape=jax.ShapeDtypeStruct((B_pad, OUT_PAD), jnp.float32),
        grid=grid,
        in_specs=[
            pl.BlockSpec((TM, F), lambda i: (i, 0)),   # streamed x tile
            pl.BlockSpec((F, H), const),               # W1 (resident)
            pl.BlockSpec((1, H), const),               # b1
            pl.BlockSpec((H, H), const),               # W2
            pl.BlockSpec((1, H), const),               # b2
            pl.BlockSpec((H, H), const),               # W3
            pl.BlockSpec((1, H), const),               # b3
            pl.BlockSpec((H, OUT_PAD), const),         # W4 (lane-padded)
            pl.BlockSpec((1, OUT_PAD), const),         # b4 (lane-padded)
        ],
        out_specs=pl.BlockSpec((TM, OUT_PAD), lambda i: (i, 0)),
        compiler_params=pltpu.CompilerParams(
            dimension_semantics=("parallel",),         # megacore on v7x
            vmem_limit_bytes=32 * 1024 * 1024,
        ),
        cost_estimate=pl.CostEstimate(
            flops=flops,
            transcendentals=0,
            bytes_accessed=x_bytes + w_bytes + out_bytes,
        ),
    )(x_p, w1, b1, w2, b2, w3, b3, w4, b4)

    return out[:B, :OUT]


def _xavier_uniform(key, fan_in, fan_out, gain):
    # PyTorch xavier_uniform_: U(-a, a), a = gain * sqrt(6 / (fan_in + fan_out)).
    a = gain * math.sqrt(6.0 / (fan_in + fan_out))
    # Stored as [in, out] (pre-transposed relative to PyTorch's [out, in]).
    return jax.random.uniform(key, (fan_in, fan_out), jnp.float32, -a, a)


def init_net3_params(key, feature, hidden, output):
    # nn.init.calculate_gain('relu', 0.2): the extra param is ignored for
    # 'relu', so the gain is sqrt(2).
    relu_gain = math.sqrt(2.0)
    keys = jax.random.split(key, 8)
    bound = 1.0 / math.sqrt(hidden)  # PyTorch default Linear init bound
    return {
        "w1": _xavier_uniform(keys[0], feature, hidden, relu_gain),
        "b1": 0.25 + jax.random.normal(keys[1], (1, hidden), jnp.float32),
        "w2": _xavier_uniform(keys[2], hidden, hidden, relu_gain),
        "b2": 0.25 + jax.random.normal(keys[3], (1, hidden), jnp.float32),
        "w3": _xavier_uniform(keys[4], hidden, hidden, relu_gain),
        "b3": 0.25 + jax.random.normal(keys[5], (1, hidden), jnp.float32),
        # Output layer: PyTorch default Linear init (uniform(-1/sqrt(fan_in), ..)).
        "w4": jax.random.uniform(keys[6], (hidden, output), jnp.float32,
                                 -bound, bound),
        "b4": jax.random.uniform(keys[7], (1, output), jnp.float32,
                                 -bound, bound),
    }


def net3_reference(x, p, compute_dtype=jnp.float32):
    """Pure-JAX reference; mirrors the kernel's MXU compute dtype."""
    def lin(h, w, b):
        return jnp.dot(h.astype(compute_dtype), w.astype(compute_dtype),
                       preferred_element_type=jnp.float32) + b
    h = jnp.maximum(lin(x, p["w1"], p["b1"]), 0.0)
    h = jnp.maximum(lin(h, p["w2"], p["b2"]), 0.0)
    h = jnp.maximum(lin(h, p["w3"], p["b3"]), 0.0)
    return lin(h, p["w4"], p["b4"])


if __name__ == "__main__":
    feature, hidden, output = 32, 64, 8
    batch = 256  # exercises the batch grid (2 tiles of 128)

    key = jax.random.PRNGKey(0)
    k_params, k_x = jax.random.split(key)
    params = init_net3_params(k_params, feature, hidden, output)
    x = jax.random.normal(k_x, (batch, feature), jnp.float32)

    # Full-f32 path: exact against the pure-JAX reference.
    y_f32 = jax.block_until_ready(
        net3_forward(x, params, compute_dtype=jnp.float32))
    ref_f32 = net3_reference(x, params, compute_dtype=jnp.float32)
    assert y_f32.shape == (batch, output), y_f32.shape
    assert jnp.allclose(y_f32, ref_f32, atol=1e-5, rtol=1e-5), \
        f"f32 max err {jnp.max(jnp.abs(y_f32 - ref_f32))}"

    # bf16-MXU path (f32 accumulation): compare against a matching bf16 reference,
    # plus a loose sanity check against the full-f32 reference.
    y_bf16 = jax.block_until_ready(
        net3_forward(x, params, compute_dtype=jnp.bfloat16))
    ref_bf16 = net3_reference(x, params, compute_dtype=jnp.bfloat16)
    assert y_bf16.shape == (batch, output), y_bf16.shape
    assert jnp.allclose(y_bf16, ref_bf16, atol=2e-2, rtol=2e-2), \
        f"bf16 max err {jnp.max(jnp.abs(y_bf16 - ref_bf16))}"
    assert jnp.allclose(y_bf16, ref_f32, atol=5e-1, rtol=1e-1)

    print("KERNEL_OK")
</pallas_src>

<mosaic_0001>
module attributes {stable_mosaic.version = 11 : i64} {
  func.func @_net3_kernel(%arg0: i32, %arg1: memref<128x32xf32, #tpu.memory_space<vmem>>, %arg2: memref<32x64xf32, #tpu.memory_space<vmem>>, %arg3: memref<1x64xf32, #tpu.memory_space<vmem>>, %arg4: memref<64x64xf32, #tpu.memory_space<vmem>>, %arg5: memref<1x64xf32, #tpu.memory_space<vmem>>, %arg6: memref<64x64xf32, #tpu.memory_space<vmem>>, %arg7: memref<1x64xf32, #tpu.memory_space<vmem>>, %arg8: memref<64x128xf32, #tpu.memory_space<vmem>>, %arg9: memref<1x128xf32, #tpu.memory_space<vmem>>, %arg10: memref<128x128xf32, #tpu.memory_space<vmem>>) attributes {dimension_semantics = [#tpu.dimension_semantics<parallel>], iteration_bounds = array<i64: 2>, scalar_prefetch = 0 : i64, scratch_operands = 0 : i64, tpu.core_type = #tpu.core_type<tc>, window_params = [{transform_indices = @transform_0, window_bounds = array<i64: 128, 32>}, {pipeline_mode = #tpu.pipeline_mode<synchronous>, transform_indices = @transform_1, window_bounds = array<i64: 32, 64>}, {pipeline_mode = #tpu.pipeline_mode<synchronous>, transform_indices = @transform_2, window_bounds = array<i64: 1, 64>}, {pipeline_mode = #tpu.pipeline_mode<synchronous>, transform_indices = @transform_3, window_bounds = array<i64: 64, 64>}, {pipeline_mode = #tpu.pipeline_mode<synchronous>, transform_indices = @transform_4, window_bounds = array<i64: 1, 64>}, {pipeline_mode = #tpu.pipeline_mode<synchronous>, transform_indices = @transform_5, window_bounds = array<i64: 64, 64>}, {pipeline_mode = #tpu.pipeline_mode<synchronous>, transform_indices = @transform_6, window_bounds = array<i64: 1, 64>}, {pipeline_mode = #tpu.pipeline_mode<synchronous>, transform_indices = @transform_7, window_bounds = array<i64: 64, 128>}, {pipeline_mode = #tpu.pipeline_mode<synchronous>, transform_indices = @transform_8, window_bounds = array<i64: 1, 128>}, {transform_indices = @transform_9, window_bounds = array<i64: 128, 128>}]} {
    %c0 = arith.constant 0 : index
    %c0_0 = arith.constant 0 : index
    %0 = vector.load %arg1[%c0, %c0_0] : memref<128x32xf32, #tpu.memory_space<vmem>>, vector<128x32xf32>
    %c0_1 = arith.constant 0 : index
    %c0_2 = arith.constant 0 : index
    %1 = vector.load %arg2[%c0_1, %c0_2] : memref<32x64xf32, #tpu.memory_space<vmem>>, vector<32x64xf32>
    %cst = arith.constant dense<0.000000e+00> : vector<128x64xf32>
    %2 = tpu.matmul %0, %1, %cst {dimension_numbers = #tpu.dot_dimension_numbers<[1], [0], [0], [1], [0, 0, 1, 1], [], []>} : vector<128x32xf32>, vector<32x64xf32>, vector<128x64xf32> -> vector<128x64xf32>
    %c0_3 = arith.constant 0 : index
    %c0_4 = arith.constant 0 : index
    %3 = vector.load %arg3[%c0_3, %c0_4] : memref<1x64xf32, #tpu.memory_space<vmem>>, vector<1x64xf32>
    %4 = vector.broadcast %3 : vector<1x64xf32> to vector<128x64xf32>
    %5 = arith.addf %2, %4 : vector<128x64xf32>
    %cst_5 = arith.constant 0.000000e+00 : f32
    %6 = vector.broadcast %cst_5 : f32 to vector<128x64xf32>
    %7 = arith.maximumf %5, %6 : vector<128x64xf32>
    %c0_6 = arith.constant 0 : index
    %c0_7 = arith.constant 0 : index
    %8 = vector.load %arg4[%c0_6, %c0_7] : memref<64x64xf32, #tpu.memory_space<vmem>>, vector<64x64xf32>
    %cst_8 = arith.constant dense<0.000000e+00> : vector<128x64xf32>
    %9 = tpu.matmul %7, %8, %cst_8 {dimension_numbers = #tpu.dot_dimension_numbers<[1], [0], [0], [1], [0, 0, 1, 1], [], []>} : vector<128x64xf32>, vector<64x64xf32>, vector<128x64xf32> -> vector<128x64xf32>
    %c0_9 = arith.constant 0 : index
    %c0_10 = arith.constant 0 : index
    %10 = vector.load %arg5[%c0_9, %c0_10] : memref<1x64xf32, #tpu.memory_space<vmem>>, vector<1x64xf32>
    %11 = vector.broadcast %10 : vector<1x64xf32> to vector<128x64xf32>
    %12 = arith.addf %9, %11 : vector<128x64xf32>
    %cst_11 = arith.constant 0.000000e+00 : f32
    %13 = vector.broadcast %cst_11 : f32 to vector<128x64xf32>
    %14 = arith.maximumf %12, %13 : vector<128x64xf32>
    %c0_12 = arith.constant 0 : index
    %c0_13 = arith.constant 0 : index
    %15 = vector.load %arg6[%c0_12, %c0_13] : memref<64x64xf32, #tpu.memory_space<vmem>>, vector<64x64xf32>
    %cst_14 = arith.constant dense<0.000000e+00> : vector<128x64xf32>
    %16 = tpu.matmul %14, %15, %cst_14 {dimension_numbers = #tpu.dot_dimension_numbers<[1], [0], [0], [1], [0, 0, 1, 1], [], []>} : vector<128x64xf32>, vector<64x64xf32>, vector<128x64xf32> -> vector<128x64xf32>
    %c0_15 = arith.constant 0 : index
    %c0_16 = arith.constant 0 : index
    %17 = vector.load %arg7[%c0_15, %c0_16] : memref<1x64xf32, #tpu.memory_space<vmem>>, vector<1x64xf32>
    %18 = vector.broadcast %17 : vector<1x64xf32> to vector<128x64xf32>
    %19 = arith.addf %16, %18 : vector<128x64xf32>
    %cst_17 = arith.constant 0.000000e+00 : f32
    %20 = vector.broadcast %cst_17 : f32 to vector<128x64xf32>
    %21 = arith.maximumf %19, %20 : vector<128x64xf32>
    %c0_18 = arith.constant 0 : index
    %c0_19 = arith.constant 0 : index
    %22 = vector.load %arg8[%c0_18, %c0_19] : memref<64x128xf32, #tpu.memory_space<vmem>>, vector<64x128xf32>
    %cst_20 = arith.constant dense<0.000000e+00> : vector<128x128xf32>
    %23 = tpu.matmul %21, %22, %cst_20 {dimension_numbers = #tpu.dot_dimension_numbers<[1], [0], [0], [1], [0, 0, 1, 1], [], []>} : vector<128x64xf32>, vector<64x128xf32>, vector<128x128xf32> -> vector<128x128xf32>
    %c0_21 = arith.constant 0 : index
    %c0_22 = arith.constant 0 : index
    %24 = vector.load %arg9[%c0_21, %c0_22] : memref<1x128xf32, #tpu.memory_space<vmem>>, vector<1x128xf32>
    %25 = vector.broadcast %24 : vector<1x128xf32> to vector<128x128xf32>
    %26 = arith.addf %23, %25 : vector<128x128xf32>
    %c0_23 = arith.constant 0 : index
    %c0_24 = arith.constant 0 : index
    %27 = vector.load %arg10[%c0_23, %c0_24] : memref<128x128xf32, #tpu.memory_space<vmem>>, vector<128x128xf32>
    tpu.vector_store %arg10[%c0_23, %c0_24], %26 {strides = array<i32>} : memref<128x128xf32, #tpu.memory_space<vmem>>, vector<128x128xf32>,
    return
  }
  func.func @transform_0(%arg0: i32) -> (i32, i32) {
    %c0_i32 = arith.constant 0 : i32
    %c0_i32_0 = arith.constant 0 : i32
    return %arg0, %c0_i32 : i32, i32
  }
  func.func @transform_1(%arg0: i32) -> (i32, i32) {
    %c0_i32 = arith.constant 0 : i32
    %c0_i32_0 = arith.constant 0 : i32
    %c0_i32_1 = arith.constant 0 : i32
    return %c0_i32, %c0_i32_0 : i32, i32
  }
  func.func @transform_2(%arg0: i32) -> (i32, i32) {
    %c0_i32 = arith.constant 0 : i32
    %c0_i32_0 = arith.constant 0 : i32
    %c0_i32_1 = arith.constant 0 : i32
    return %c0_i32, %c0_i32_0 : i32, i32
  }
  func.func @transform_3(%arg0: i32) -> (i32, i32) {
    %c0_i32 = arith.constant 0 : i32
    %c0_i32_0 = arith.constant 0 : i32
    %c0_i32_1 = arith.constant 0 : i32
    return %c0_i32, %c0_i32_0 : i32, i32
  }
  func.func @transform_4(%arg0: i32) -> (i32, i32) {
    %c0_i32 = arith.constant 0 : i32
    %c0_i32_0 = arith.constant 0 : i32
    %c0_i32_1 = arith.constant 0 : i32
    return %c0_i32, %c0_i32_0 : i32, i32
  }
  func.func @transform_5(%arg0: i32) -> (i32, i32) {
    %c0_i32 = arith.constant 0 : i32
    %c0_i32_0 = arith.constant 0 : i32
    %c0_i32_1 = arith.constant 0 : i32
    return %c0_i32, %c0_i32_0 : i32, i32
  }
  func.func @transform_6(%arg0: i32) -> (i32, i32) {
    %c0_i32 = arith.constant 0 : i32
    %c0_i32_0 = arith.constant 0 : i32
    %c0_i32_1 = arith.constant 0 : i32
    return %c0_i32, %c0_i32_0 : i32, i32
  }
  func.func @transform_7(%arg0: i32) -> (i32, i32) {
    %c0_i32 = arith.constant 0 : i32
    %c0_i32_0 = arith.constant 0 : i32
    %c0_i32_1 = arith.constant 0 : i32
    return %c0_i32, %c0_i32_0 : i32, i32
  }
  func.func @transform_8(%arg0: i32) -> (i32, i32) {
    %c0_i32 = arith.constant 0 : i32
    %c0_i32_0 = arith.constant 0 : i32
    %c0_i32_1 = arith.constant 0 : i32
    return %c0_i32, %c0_i32_0 : i32, i32
  }
  func.func @transform_9(%arg0: i32) -> (i32, i32) {
    %c0_i32 = arith.constant 0 : i32
    %c0_i32_0 = arith.constant 0 : i32
    return %arg0, %c0_i32 : i32, i32
  }
}

</mosaic_0001>

<llo_original>
// kernel: tpu_custom_call.1
$region0: #{tpu_custom_call.1}
  #allocation0 [shape = 'u32[]', space=smem, size = 0x4, offset = 0x4, fixed_abs, tag = 'smem constant byte address 0x4 - core index']
  #allocation1 [shape = 'u32[144,128]{1,0:T(1,128)}', space=vmem, size = 0x12000, scoped, tag = 'internal scratch']
  %s0 = inlined_call_operand.vmem [shape: f32[256,32], index: 0, kind: input, shape index: {}]
  %s1 = inlined_call_operand.vmem [shape: f32[32,64], index: 1, kind: input, shape index: {}]
  %s2 = inlined_call_operand.vmem [shape: f32[1,64], index: 2, kind: input, shape index: {}]
  %s3 = inlined_call_operand.vmem [shape: f32[64,64], index: 3, kind: input, shape index: {}]
  %s4 = inlined_call_operand.vmem [shape: f32[1,64], index: 4, kind: input, shape index: {}]
  %s5 = inlined_call_operand.vmem [shape: f32[64,64], index: 5, kind: input, shape index: {}]
  %s6 = inlined_call_operand.vmem [shape: f32[1,64], index: 6, kind: input, shape index: {}]
  %s7 = inlined_call_operand.vmem [shape: f32[64,128], index: 7, kind: input, shape index: {}]
  %s8 = inlined_call_operand.vmem [shape: f32[1,128], index: 8, kind: input, shape index: {}]
  %s9 = inlined_call_operand.hbm [shape: f32[256,128], index: 9, kind: output, shape index: {}]
  %s10 = sld [smem:[#allocation0]]
  $region69: #{tpu_custom_call.1} parent=0
    _
  %s12 = ssub.s32 1, %s10
  %s13 = scalar_select 0, %s12, %s10
  $region1: #{tpu_custom_call.1} parent=0
    #allocation2 [shape = 'u8[131072]{0}', space=vmem, size = 0x20000, scoped, tag = 'output window, operand 0']
    #allocation3 [shape = 's32[2]{0}', space=sflag, size = 0x8, scoped, tag = 'scoped memory for tpu_custom_call.1']
    %14 = vsyncpa [#allocation3], 0
    %s15 = scalar_lea.sflag [#allocation3], 1
    %16 = vsyncpa %s15, 0
    loop: start=0, step=1, limit=4
    $region2: #{tpu_custom_call.1} parent=1 // loop_pre_header
      _
    $region3: #{tpu_custom_call.1} parent=1 // loop_header
      %s18 = sphi 0, %s22
      %p19 = scmp.ge.s32.totalorder %s18, 4
      %s28 = sphi 0, %s30
      %s31 = sphi 0, %s28
      %s32 = sphi 0, %s31
      %s48 = sphi 0, %s32
      %s52 = sphi 0, %s52
      %s54 = sphi 0, %s52
      %s55 = sphi 0, %s54
      %s69 = sphi 0, %s55
      %s73 = sphi 0, %s73
      %s75 = sphi 0, %s73
      %s76 = sphi 0, %s75
      %s90 = sphi 0, %s76
      %s94 = sphi 0, %s94
      %s96 = sphi 0, %s94
      %s97 = sphi 0, %s96
      %s111 = sphi 0, %s97
      %s115 = sphi 0, %s115
      %s117 = sphi 0, %s115
      %s118 = sphi 0, %s117
      %s132 = sphi 0, %s118
      %s136 = sphi 0, %s136
      %s138 = sphi 0, %s136
      %s139 = sphi 0, %s138
      %s153 = sphi 0, %s139
      %s157 = sphi 0, %s157
      %s159 = sphi 0, %s157
      %s160 = sphi 0, %s159
      %s174 = sphi 0, %s160
      %s178 = sphi 0, %s178
      %s180 = sphi 0, %s178
      %s181 = sphi 0, %s180
      %s195 = sphi 0, %s181
      %s199 = sphi 0, %s199
      %s201 = sphi 0, %s199
      %s202 = sphi 0, %s201
      %s216 = sphi 0, %s202
      %s222 = sphi 0, %s224
      %s225 = sphi 0, %s222
      %s226 = sphi 0, %s225
      %s242 = sphi 0, %s226
    $region4: #{tpu_custom_call.1} parent=1 // loop_header_branch
      %21 = sbr.rel (%p19) target = $region8
    $region5: #{tpu_custom_call.1} parent=1 // loop_body
      %s23 = ssub.s32 %s18, 1
      %s24 = ssub.s32 %s18, 2
      %s25 = sadd.s32 %s18, 1
      %s26 = ssub.s32 %s18, %s25
      %p27 = scmp.eq.s32.totalorder %s26, 0
      %s29 = sadd.s32 %s28, 1
      %s30 = scalar_select %p27, %s28, %s29
      %p33 = pneg %p27
      %p34 = scmp.eq.s32.totalorder %s18, 1
      %p35 = por %p33, %p34
      %p36 = scmp.ne.s32.totalorder %s28, %s31
      %p37 = scmp.eq.s32.totalorder %s18, 0
      %p38 = por %p36, %p37
      %p39 = scmp.ne.s32.totalorder %s28, %s31
      %p40 = scmp.eq.s32.totalorder %s23, 1
      %p41 = por %p39, %p40
      %p42 = scmp.ne.s32.totalorder %s31, %s32
      %p43 = scmp.eq.s32.totalorder %s23, 0
      %p44 = por %p42, %p43
      %p45 = scmp.ne.s32.totalorder %s31, %s32
      %p46 = scmp.eq.s32.totalorder %s24, 1
      %p47 = por %p45, %p46
      %p49 = scmp.ne.s32.totalorder %s32, %s48
      %p50 = scmp.eq.s32.totalorder %s24, 0
      %p51 = por %p49, %p50
      %s53 = sadd.s32 %s52, 1
      %p56 = scmp.eq.s32.totalorder %s18, 1
      %p57 = scmp.ne.s32.totalorder %s52, %s54
      %p58 = scmp.eq.s32.totalorder %s18, 0
      %p59 = por %p57, %p58
      %p60 = scmp.ne.s32.totalorder %s52, %s54
      %p61 = scmp.eq.s32.totalorder %s23, 1
      %p62 = por %p60, %p61
      %p63 = scmp.ne.s32.totalorder %s54, %s55
      %p64 = scmp.eq.s32.totalorder %s23, 0
      %p65 = por %p63, %p64
      %p66 = scmp.ne.s32.totalorder %s54, %s55
      %p67 = scmp.eq.s32.totalorder %s24, 1
      %p68 = por %p66, %p67
      %p70 = scmp.ne.s32.totalorder %s55, %s69
      %p71 = scmp.eq.s32.totalorder %s24, 0
      %p72 = por %p70, %p71
      %s74 = sadd.s32 %s73, 1
      %p77 = scmp.eq.s32.totalorder %s18, 1
      %p78 = scmp.ne.s32.totalorder %s73, %s75
      %p79 = scmp.eq.s32.totalorder %s18, 0
      %p80 = por %p78, %p79
      %p81 = scmp.ne.s32.totalorder %s73, %s75
      %p82 = scmp.eq.s32.totalorder %s23, 1
      %p83 = por %p81, %p82
      %p84 = scmp.ne.s32.totalorder %s75, %s76
      %p85 = scmp.eq.s32.totalorder %s23, 0
      %p86 = por %p84, %p85
      %p87 = scmp.ne.s32.totalorder %s75, %s76
      %p88 = scmp.eq.s32.totalorder %s24, 1
      %p89 = por %p87, %p88
      %p91 = scmp.ne.s32.totalorder %s76, %s90
      %p92 = scmp.eq.s32.totalorder %s24, 0
      %p93 = por %p91, %p92
      %s95 = sadd.s32 %s94, 1
      %p98 = scmp.eq.s32.totalorder %s18, 1
      %p99 = scmp.ne.s32.totalorder %s94, %s96
      %p100 = scmp.eq.s32.totalorder %s18, 0
      %p101 = por %p99, %p100
      %p102 = scmp.ne.s32.totalorder %s94, %s96
      %p103 = scmp.eq.s32.totalorder %s23, 1
      %p104 = por %p102, %p103
      %p105 = scmp.ne.s32.totalorder %s96, %s97
      %p106 = scmp.eq.s32.totalorder %s23, 0
      %p107 = por %p105, %p106
      %p108 = scmp.ne.s32.totalorder %s96, %s97
      %p109 = scmp.eq.s32.totalorder %s24, 1
      %p110 = por %p108, %p109
      %p112 = scmp.ne.s32.totalorder %s97, %s111
      %p113 = scmp.eq.s32.totalorder %s24, 0
      %p114 = por %p112, %p113
      %s116 = sadd.s32 %s115, 1
      %p119 = scmp.eq.s32.totalorder %s18, 1
      %p120 = scmp.ne.s32.totalorder %s115, %s117
      %p121 = scmp.eq.s32.totalorder %s18, 0
      %p122 = por %p120, %p121
      %p123 = scmp.ne.s32.totalorder %s115, %s117
      %p124 = scmp.eq.s32.totalorder %s23, 1
      %p125 = por %p123, %p124
      %p126 = scmp.ne.s32.totalorder %s117, %s118
      %p127 = scmp.eq.s32.totalorder %s23, 0
      %p128 = por %p126, %p127
      %p129 = scmp.ne.s32.totalorder %s117, %s118
      %p130 = scmp.eq.s32.totalorder %s24, 1
      %p131 = por %p129, %p130
      %p133 = scmp.ne.s32.totalorder %s118, %s132
      %p134 = scmp.eq.s32.totalorder %s24, 0
      %p135 = por %p133, %p134
      %s137 = sadd.s32 %s136, 1
      %p140 = scmp.eq.s32.totalorder %s18, 1
      %p141 = scmp.ne.s32.totalorder %s136, %s138
      %p142 = scmp.eq.s32.totalorder %s18, 0
      %p143 = por %p141, %p142
      %p144 = scmp.ne.s32.totalorder %s136, %s138
      %p145 = scmp.eq.s32.totalorder %s23, 1
      %p146 = por %p144, %p145
      %p147 = scmp.ne.s32.totalorder %s138, %s139
      %p148 = scmp.eq.s32.totalorder %s23, 0
      %p149 = por %p147, %p148
      %p150 = scmp.ne.s32.totalorder %s138, %s139
      %p151 = scmp.eq.s32.totalorder %s24, 1
      %p152 = por %p150, %p151
      %p154 = scmp.ne.s32.totalorder %s139, %s153
      %p155 = scmp.eq.s32.totalorder %s24, 0
      %p156 = por %p154, %p155
      %s158 = sadd.s32 %s157, 1
      %p161 = scmp.eq.s32.totalorder %s18, 1
      %p162 = scmp.ne.s32.totalorder %s157, %s159
      %p163 = scmp.eq.s32.totalorder %s18, 0
      %p164 = por %p162, %p163
      %p165 = scmp.ne.s32.totalorder %s157, %s159
      %p166 = scmp.eq.s32.totalorder %s23, 1
      %p167 = por %p165, %p166
      %p168 = scmp.ne.s32.totalorder %s159, %s160
      %p169 = scmp.eq.s32.totalorder %s23, 0
      %p170 = por %p168, %p169
      %p171 = scmp.ne.s32.totalorder %s159, %s160
      %p172 = scmp.eq.s32.totalorder %s24, 1
      %p173 = por %p171, %p172
      %p175 = scmp.ne.s32.totalorder %s160, %s174
      %p176 = scmp.eq.s32.totalorder %s24, 0
      %p177 = por %p175, %p176
      %s179 = sadd.s32 %s178, 1
      %p182 = scmp.eq.s32.totalorder %s18, 1
      %p183 = scmp.ne.s32.totalorder %s178, %s180
      %p184 = scmp.eq.s32.totalorder %s18, 0
      %p185 = por %p183, %p184
      %p186 = scmp.ne.s32.totalorder %s178, %s180
      %p187 = scmp.eq.s32.totalorder %s23, 1
      %p188 = por %p186, %p187
      %p189 = scmp.ne.s32.totalorder %s180, %s181
      %p190 = scmp.eq.s32.totalorder %s23, 0
      %p191 = por %p189, %p190
      %p192 = scmp.ne.s32.totalorder %s180, %s181
      %p193 = scmp.eq.s32.totalorder %s24, 1
      %p194 = por %p192, %p193
      %p196 = scmp.ne.s32.totalorder %s181, %s195
      %p197 = scmp.eq.s32.totalorder %s24, 0
      %p198 = por %p196, %p197
      %s200 = sadd.s32 %s199, 1
      %p203 = scmp.eq.s32.totalorder %s18, 1
      %p204 = scmp.ne.s32.totalorder %s199, %s201
      %p205 = scmp.eq.s32.totalorder %s18, 0
      %p206 = por %p204, %p205
      %p207 = scmp.ne.s32.totalorder %s199, %s201
      %p208 = scmp.eq.s32.totalorder %s23, 1
      %p209 = por %p207, %p208
      %p210 = scmp.ne.s32.totalorder %s201, %s202
      %p211 = scmp.eq.s32.totalorder %s23, 0
      %p212 = por %p210, %p211
      %p213 = scmp.ne.s32.totalorder %s201, %s202
      %p214 = scmp.eq.s32.totalorder %s24, 1
      %p215 = por %p213, %p214
      %p217 = scmp.ne.s32.totalorder %s202, %s216
      %p218 = scmp.eq.s32.totalorder %s24, 0
      %p219 = por %p217, %p218
      %s220 = ssub.s32 %s18, %s25
      %p221 = scmp.eq.s32.totalorder %s220, 0
      %s223 = sadd.s32 %s222, 1
      %s224 = scalar_select %p221, %s222, %s223
      %p227 = pneg %p221
      %p228 = scmp.eq.s32.totalorder %s18, 1
      %p229 = por %p227, %p228
      %p230 = scmp.ne.s32.totalorder %s222, %s225
      %p231 = scmp.eq.s32.totalorder %s18, 0
      %p232 = por %p230, %p231
      %p233 = scmp.ne.s32.totalorder %s222, %s225
      %p234 = scmp.eq.s32.totalorder %s23, 1
      %p235 = por %p233, %p234
      %p236 = scmp.ne.s32.totalorder %s225, %s226
      %p237 = scmp.eq.s32.totalorder %s23, 0
      %p238 = por %p236, %p237
      %p239 = scmp.ne.s32.totalorder %s225, %s226
      %p240 = scmp.eq.s32.totalorder %s24, 1
      %p241 = por %p239, %p240
      %p243 = scmp.ne.s32.totalorder %s226, %s242
      %p244 = scmp.eq.s32.totalorder %s24, 0
      %p245 = por %p243, %p244
      %p246 = scmp.le.s32.totalorder 1, %s18
      %p247 = scmp.lt.s32.totalorder %s18, 3
      %p248 = pnand %p246, %p247
      %p249 = pneg %p248
      // Predicated region
      $region9: #{tpu_custom_call.1} parent=5 // pred_check
        _
      $region10: #{tpu_custom_call.1} parent=5 // pred_check_branch
        %251 = sbr.rel (%p248) target = $region12
      $region11: #{tpu_custom_call.1} parent=5 // pred_region
        %s252 = ssub.s32 %s18, 1
        // Predicated region
        $region13: #{tpu_custom_call.1} parent=11 // pred_check
          %p253 = pneg %p65
        $region14: #{tpu_custom_call.1} parent=11 // pred_check_branch
          %255 = sbr.rel (%p253) target = $region16
        $region15: #{tpu_custom_call.1} parent=11 // pred_region
          _
        $region16: #{tpu_custom_call.1} parent=11 // pred_fallthru
          _
        // Predicated region
        $region17: #{tpu_custom_call.1} parent=11 // pred_check
          %p256 = pneg %p86
        $region18: #{tpu_custom_call.1} parent=11 // pred_check_branch
          %258 = sbr.rel (%p256) target = $region20
        $region19: #{tpu_custom_call.1} parent=11 // pred_region
          _
        $region20: #{tpu_custom_call.1} parent=11 // pred_fallthru
          _
        // Predicated region
        $region21: #{tpu_custom_call.1} parent=11 // pred_check
          %p259 = pneg %p107
        $region22: #{tpu_custom_call.1} parent=11 // pred_check_branch
          %261 = sbr.rel (%p259) target = $region24
        $region23: #{tpu_custom_call.1} parent=11 // pred_region
          _
        $region24: #{tpu_custom_call.1} parent=11 // pred_fallthru
          _
        // Predicated region
        $region25: #{tpu_custom_call.1} parent=11 // pred_check
          %p262 = pneg %p128
        $region26: #{tpu_custom_call.1} parent=11 // pred_check_branch
          %264 = sbr.rel (%p262) target = $region28
        $region27: #{tpu_custom_call.1} parent=11 // pred_region
          _
        $region28: #{tpu_custom_call.1} parent=11 // pred_fallthru
          _
        // Predicated region
        $region29: #{tpu_custom_call.1} parent=11 // pred_check
          %p265 = pneg %p149
        $region30: #{tpu_custom_call.1} parent=11 // pred_check_branch
          %267 = sbr.rel (%p265) target = $region32
        $region31: #{tpu_custom_call.1} parent=11 // pred_region
          _
        $region32: #{tpu_custom_call.1} parent=11 // pred_fallthru
          _
        // Predicated region
        $region33: #{tpu_custom_call.1} parent=11 // pred_check
          %p268 = pneg %p170
        $region34: #{tpu_custom_call.1} parent=11 // pred_check_branch
          %270 = sbr.rel (%p268) target = $region36
        $region35: #{tpu_custom_call.1} parent=11 // pred_region
          _
        $region36: #{tpu_custom_call.1} parent=11 // pred_fallthru
          _
        // Predicated region
        $region37: #{tpu_custom_call.1} parent=11 // pred_check
          %p271 = pneg %p191
        $region38: #{tpu_custom_call.1} parent=11 // pred_check_branch
          %273 = sbr.rel (%p271) target = $region40
        $region39: #{tpu_custom_call.1} parent=11 // pred_region
          _
        $region40: #{tpu_custom_call.1} parent=11 // pred_fallthru
          _
        // Predicated region
        $region41: #{tpu_custom_call.1} parent=11 // pred_check
          %p274 = pneg %p212
        $region42: #{tpu_custom_call.1} parent=11 // pred_check_branch
          %276 = sbr.rel (%p274) target = $region44
        $region43: #{tpu_custom_call.1} parent=11 // pred_region
          _
        $region44: #{tpu_custom_call.1} parent=11 // pred_fallthru
          _
      $region12: #{tpu_custom_call.1} parent=5 // pred_fallthru
        _
      %p277 = scmp.lt.s32.totalorder %s18, 2
      // Predicated region
      $region45: #{tpu_custom_call.1} parent=5 // pred_check
        %p278 = pneg %p277
      $region46: #{tpu_custom_call.1} parent=5 // pred_check_branch
        %280 = sbr.rel (%p278) target = $region48
      $region47: #{tpu_custom_call.1} parent=5 // pred_region
        // Predicated region
        $region49: #{tpu_custom_call.1} parent=47 // pred_check
          %p281 = pneg %p38
        $region50: #{tpu_custom_call.1} parent=47 // pred_check_branch
          %283 = sbr.rel (%p281) target = $region52
        $region51: #{tpu_custom_call.1} parent=47 // pred_region
          %s284 = smul.u32 16, %s18
          %p285 = scmp.lt.s32.totalorder %s284, 31
          %s286 = scalar_select %p285, %s284, 31
          %s287 = smul.addr %s286, 8
          %s288 = scalar_lea.vmem %s0, %s287
          %s289 = smul.u32 16, %s18
        $region52: #{tpu_custom_call.1} parent=47 // pred_fallthru
          _
      $region48: #{tpu_custom_call.1} parent=5 // pred_fallthru
        _
      %p290 = scmp.le.s32.totalorder 1, %s18
      %p291 = scmp.lt.s32.totalorder %s18, 3
      %p292 = pnand %p290, %p291
      %p293 = pneg %p292
      // Predicated region
      $region53: #{tpu_custom_call.1} parent=5 // pred_check
        _
      $region54: #{tpu_custom_call.1} parent=5 // pred_check_branch
        %295 = sbr.rel (%p292) target = $region56
      $region55: #{tpu_custom_call.1} parent=5 // pred_region
        %s296 = ssub.s32 %s18, 1
        %s297 = smul.u32 16, %s23
        %p298 = scmp.lt.s32.totalorder %s297, 31
        %s299 = scalar_select %p298, %s297, 31
        %s300 = smul.addr %s299, 8
        %s301 = scalar_lea.vmem %s0, %s300
        %p302 = pneg %p44
        %p303 = pneg %p41
        %p304 = pneg %p65
        %p305 = pneg %p62
        %p306 = pneg %p86
        %p307 = pneg %p83
        %p308 = pneg %p107
        %p309 = pneg %p104
        %p310 = pneg %p128
        %p311 = pneg %p125
        %p312 = pneg %p149
        %p313 = pneg %p146
        %p314 = pneg %p170
        %p315 = pneg %p167
        %p316 = pneg %p191
        %p317 = pneg %p188
        %p318 = pneg %p212
        %p319 = pneg %p209
        %p320 = pneg %p238
        %p321 = pneg %p235
        %s322 = sand.u32 %s225, 1
        %s323 = scalar_lea.sflag [#allocation3], %s322
        %s324 = sand.u32 %s225, 1
        %s325 = smul.addr %s324, 128
        %s326 = scalar_lea.vmem [#allocation2], %s325
        %s327 = smul.u32 16, %s23
        %p328 = scmp.lt.s32.totalorder %s327, 31
        %s329 = scalar_select %p328, %s327, 31
        %s330 = smul.addr %s329, 8
        %s331 = scalar_lea.vmem %s0, %s330
        %s332 = smul.u32 16, %s23
        %s333 = smul.u32 16, %s23
        %v334 = vld [vmem:[%s331] sm:$0xff]
        %v335 = vld [vmem:[%s331 + $0x8] sm:$0xff]
        %v336 = vld [vmem:[%s331 + $0x10] sm:$0xff]
        %v337 = vld [vmem:[%s331 + $0x18] sm:$0xff]
        %v338 = vld [vmem:[%s331 + $0x20] sm:$0xff]
        %v339 = vld [vmem:[%s331 + $0x28] sm:$0xff]
        %v340 = vld [vmem:[%s331 + $0x30] sm:$0xff]
        %v341 = vld [vmem:[%s331 + $0x38] sm:$0xff]
        %v342 = vld [vmem:[%s331 + $0x40] sm:$0xff]
        %v343 = vld [vmem:[%s331 + $0x48] sm:$0xff]
        %v344 = vld [vmem:[%s331 + $0x50] sm:$0xff]
        %v345 = vld [vmem:[%s331 + $0x58] sm:$0xff]
        %v346 = vld [vmem:[%s331 + $0x60] sm:$0xff]
        %v347 = vld [vmem:[%s331 + $0x68] sm:$0xff]
        %v348 = vld [vmem:[%s331 + $0x70] sm:$0xff]
        %v349 = vld [vmem:[%s331 + $0x78] sm:$0xff]
        %v350 = vld [vmem:[%s1] sm:$0xff]
        %v351 = vld [vmem:[%s1 + $0x8] sm:$0xff]
        %v352 = vld [vmem:[%s1 + $0x10] sm:$0xff]
        %v353 = vld [vmem:[%s1 + $0x18] sm:$0xff]
        %v354 = vld [vmem:[%s2] sm:$0x1]
        %v356 = vlaneseq
        %v357 = vshrl.u32 %v356, 7
        %v358 = vsub.s32 0, %v357
        %v359 = vrot.slane %v354, %v358
        %vm361 = vcmask 261120
        %v363 = vsel %vm361, %v334, 0
        %v366 = vsel %vm361, %v335, 0
        %v369 = vsel %vm361, %v336, 0
        %v372 = vsel %vm361, %v337, 0
        %v375 = vsel %vm361, %v338, 0
        %v378 = vsel %vm361, %v339, 0
        %v381 = vsel %vm361, %v340, 0
        %v384 = vsel %vm361, %v341, 0
        %v387 = vsel %vm361, %v342, 0
        %v390 = vsel %vm361, %v343, 0
        %v393 = vsel %vm361, %v344, 0
        %v396 = vsel %vm361, %v345, 0
        %v399 = vsel %vm361, %v346, 0
        %v402 = vsel %vm361, %v347, 0
        %v405 = vsel %vm361, %v348, 0
        %v408 = vsel %vm361, %v349, 0
        %410 = vmatprep.subr.mxu0 0.0
        %411 = vmatpush1.msra.mxu0 0.0
        %412 = vmatprep.subr.mxu0 0.0
        %413 = vmatpush1.msra.mxu0 0.0
        %414 = vmatprep.subr.mxu0 0.0
        %415 = vmatpush1.msra.mxu0 0.0
        %416 = vmatprep.subr.mxu0 0.0
        %417 = vmatpush1.msra.mxu0 0.0
        %418 = vmatprep.subr.mxu0 0.0
        %419 = vmatpush1.msra.mxu0 0.0
        %420 = vmatprep.subr.mxu0 0.0
        %421 = vmatpush1.msra.mxu0 0.0
        %422 = vmatprep.subr.mxu0 0.0
        %423 = vmatpush1.msra.mxu0 0.0
        %424 = vmatprep.subr.mxu0 0.0
        %425 = vmatpush1.msra.mxu0 0.0
        %426 = vmatprep.subr.mxu0 0.0
        %427 = vmatpush1.msra.mxu0 0.0
        %428 = vmatprep.subr.mxu0 0.0
        %429 = vmatpush1.msra.mxu0 0.0
        %430 = vmatprep.subr.mxu0 0.0
        %431 = vmatpush1.msra.mxu0 0.0
        %432 = vmatprep.subr.mxu0 0.0
        %433 = vmatpush1.msra.mxu0 0.0
        %434 = vmatprep.subr.mxu0 0.0
        %435 = vmatpush1.msra.mxu0 %v353
        %436 = vmatprep.subr.mxu0 0.0
        %437 = vmatpush1.msra.mxu0 %v352
        %438 = vmatprep.subr.mxu0 0.0
        %439 = vmatpush1.msra.mxu0 %v351
        %440 = vmatprep.subr.mxu0 0.0
        %441 = vmatpush1.msra.mxu0 %v350
        %442 = vmatprep.subr.mxu0 0.0
        %443 = vmatpush2.msra.mxu0 0.0
        %444 = vmatprep.subr.mxu0 0.0
        %445 = vmatpush2.msra.mxu0 0.0
        %446 = vmatprep.subr.mxu0 0.0
        %447 = vmatpush2.msra.mxu0 0.0
        %448 = vmatprep.subr.mxu0 0.0
        %449 = vmatpush2.msra.mxu0 0.0
        %450 = vmatprep.subr.mxu0 0.0
        %451 = vmatpush2.msra.mxu0 0.0
        %452 = vmatprep.subr.mxu0 0.0
        %453 = vmatpush2.msra.mxu0 0.0
        %454 = vmatprep.subr.mxu0 0.0
        %455 = vmatpush2.msra.mxu0 0.0
        %456 = vmatprep.subr.mxu0 0.0
        %457 = vmatpush2.msra.mxu0 0.0
        %458 = vmatprep.subr.mxu0 0.0
        %459 = vmatpush2.msra.mxu0 0.0
        %460 = vmatprep.subr.mxu0 0.0
        %461 = vmatpush2.msra.mxu0 0.0
        %462 = vmatprep.subr.mxu0 0.0
        %463 = vmatpush2.msra.mxu0 0.0
        %464 = vmatprep.subr.mxu0 0.0
        %465 = vmatpush2.msra.mxu0 0.0
        %466 = vmatprep.subr.mxu0 0.0
        %467 = vmatpush2.msra.mxu0 0.0
        %468 = vmatprep.subr.mxu0 0.0
        %469 = vmatpush2.msra.mxu0 0.0
        %470 = vmatprep.subr.mxu0 0.0
        %471 = vmatpush2.msra.mxu0 0.0
        %472 = vmatprep.subr.mxu0 0.0
        %473 = vmatpush2.msra.mxu0 0.0
        %474 = vmatprep.mubr.f32.mxu0 0.0
        %475 = vmatmul.mubr.f32.gmra.mxu0 %v363
        %v476 = vpop.f32.mrf.mxu0
        %v477 = vadd.f32 %v359, %v476
        %v478 = vpop.f32.mrf.mxu0
        %479 = vmatprep.mubr.f32.mxu0 0.0
        %480 = vmatmul.mubr.f32.gmra.mxu0 %v366
        %v481 = vpop.f32.mrf.mxu0
        %v482 = vadd.f32 %v359, %v481
        %v483 = vpop.f32.mrf.mxu0
        %484 = vmatprep.mubr.f32.mxu0 0.0
        %485 = vmatmul.mubr.f32.gmra.mxu0 %v369
        %v486 = vpop.f32.mrf.mxu0
        %v487 = vadd.f32 %v359, %v486
        %v488 = vpop.f32.mrf.mxu0
        %489 = vmatprep.mubr.f32.mxu0 0.0
        %490 = vmatmul.mubr.f32.gmra.mxu0 %v372
        %v491 = vpop.f32.mrf.mxu0
        %v492 = vadd.f32 %v359, %v491
        %v493 = vpop.f32.mrf.mxu0
        %494 = vmatprep.mubr.f32.mxu0 0.0
        %495 = vmatmul.mubr.f32.gmra.mxu0 %v375
        %v496 = vpop.f32.mrf.mxu0
        %v497 = vadd.f32 %v359, %v496
        %v498 = vpop.f32.mrf.mxu0
        %499 = vmatprep.mubr.f32.mxu0 0.0
        %500 = vmatmul.mubr.f32.gmra.mxu0 %v378
        %v501 = vpop.f32.mrf.mxu0
        %v502 = vadd.f32 %v359, %v501
        %v503 = vpop.f32.mrf.mxu0
        %504 = vmatprep.mubr.f32.mxu0 0.0
        %505 = vmatmul.mubr.f32.gmra.mxu0 %v381
        %v506 = vpop.f32.mrf.mxu0
        %v507 = vadd.f32 %v359, %v506
        %v508 = vpop.f32.mrf.mxu0
        %509 = vmatprep.mubr.f32.mxu0 0.0
        %510 = vmatmul.mubr.f32.gmra.mxu0 %v384
        %v511 = vpop.f32.mrf.mxu0
        %v512 = vadd.f32 %v359, %v511
        %v513 = vpop.f32.mrf.mxu0
        %514 = vmatprep.mubr.f32.mxu0 0.0
        %515 = vmatmul.mubr.f32.gmra.mxu0 %v387
        %v516 = vpop.f32.mrf.mxu0
        %v517 = vadd.f32 %v359, %v516
        %v518 = vpop.f32.mrf.mxu0
        %519 = vmatprep.mubr.f32.mxu0 0.0
        %520 = vmatmul.mubr.f32.gmra.mxu0 %v390
        %v521 = vpop.f32.mrf.mxu0
        %v522 = vadd.f32 %v359, %v521
        %v523 = vpop.f32.mrf.mxu0
        %524 = vmatprep.mubr.f32.mxu0 0.0
        %525 = vmatmul.mubr.f32.gmra.mxu0 %v393
        %v526 = vpop.f32.mrf.mxu0
        %v527 = vadd.f32 %v359, %v526
        %v528 = vpop.f32.mrf.mxu0
        %529 = vmatprep.mubr.f32.mxu0 0.0
        %530 = vmatmul.mubr.f32.gmra.mxu0 %v396
        %v531 = vpop.f32.mrf.mxu0
        %v532 = vadd.f32 %v359, %v531
        %v533 = vpop.f32.mrf.mxu0
        %534 = vmatprep.mubr.f32.mxu0 0.0
        %535 = vmatmul.mubr.f32.gmra.mxu0 %v399
        %v536 = vpop.f32.mrf.mxu0
        %v537 = vadd.f32 %v359, %v536
        %v538 = vpop.f32.mrf.mxu0
        %539 = vmatprep.mubr.f32.mxu0 0.0
        %540 = vmatmul.mubr.f32.gmra.mxu0 %v402
        %v541 = vpop.f32.mrf.mxu0
        %v542 = vadd.f32 %v359, %v541
        %v543 = vpop.f32.mrf.mxu0
        %544 = vmatprep.mubr.f32.mxu0 0.0
        %545 = vmatmul.mubr.f32.gmra.mxu0 %v405
        %v546 = vpop.f32.mrf.mxu0
        %v547 = vadd.f32 %v359, %v546
        %v548 = vpop.f32.mrf.mxu0
        %549 = vmatprep.mubr.f32.mxu0 0.0
        %550 = vmatmul.mubr.f32.gmra.mxu0 %v408
        %v551 = vpop.f32.mrf.mxu0
        %v552 = vadd.f32 %v359, %v551
        %v553 = vpop.f32.mrf.mxu0
        %554 = vdwg.mxu0
        %v555 = vmax.f32 %v477, 0.0
        %v556 = vmax.f32 %v482, 0.0
        %v557 = vmax.f32 %v487, 0.0
        %v558 = vmax.f32 %v492, 0.0
        %v559 = vmax.f32 %v497, 0.0
        %v560 = vmax.f32 %v502, 0.0
        %v561 = vmax.f32 %v507, 0.0
        %v562 = vmax.f32 %v512, 0.0
        %v563 = vmax.f32 %v517, 0.0
        %v564 = vmax.f32 %v522, 0.0
        %v565 = vmax.f32 %v527, 0.0
        %v566 = vmax.f32 %v532, 0.0
        %v567 = vmax.f32 %v537, 0.0
        %v568 = vmax.f32 %v542, 0.0
        %v569 = vmax.f32 %v547, 0.0
        %v570 = vmax.f32 %v552, 0.0
        %v571 = vld [vmem:[%s3] sm:$0xff]
        %v572 = vld [vmem:[%s3 + $0x8] sm:$0xff]
        %v573 = vld [vmem:[%s3 + $0x10] sm:$0xff]
        %v574 = vld [vmem:[%s3 + $0x18] sm:$0xff]
        %v575 = vld [vmem:[%s3 + $0x20] sm:$0xff]
        %v576 = vld [vmem:[%s3 + $0x28] sm:$0xff]
        %v577 = vld [vmem:[%s3 + $0x30] sm:$0xff]
        %v578 = vld [vmem:[%s3 + $0x38] sm:$0xff]
        %v579 = vld [vmem:[%s4] sm:$0x1]
        %v581 = vlaneseq
        %v582 = vshrl.u32 %v581, 7
        %v583 = vsub.s32 0, %v582
        %v584 = vrot.slane %v579, %v583
        %vm586 = vcmask 523264
        %v588 = vsel %vm586, %v555, 0
        %v591 = vsel %vm586, %v556, 0
        %v594 = vsel %vm586, %v557, 0
        %v597 = vsel %vm586, %v558, 0
        %v600 = vsel %vm586, %v559, 0
        %v603 = vsel %vm586, %v560, 0
        %v606 = vsel %vm586, %v561, 0
        %v609 = vsel %vm586, %v562, 0
        %v612 = vsel %vm586, %v563, 0
        %v615 = vsel %vm586, %v564, 0
        %v618 = vsel %vm586, %v565, 0
        %v621 = vsel %vm586, %v566, 0
        %v624 = vsel %vm586, %v567, 0
        %v627 = vsel %vm586, %v568, 0
        %v630 = vsel %vm586, %v569, 0
        %v633 = vsel %vm586, %v570, 0
        %635 = vmatprep.subr.mxu0 0.0
        %636 = vmatpush1.msra.mxu0 0.0
        %637 = vmatprep.subr.mxu0 0.0
        %638 = vmatpush1.msra.mxu0 0.0
        %639 = vmatprep.subr.mxu0 0.0
        %640 = vmatpush1.msra.mxu0 0.0
        %641 = vmatprep.subr.mxu0 0.0
        %642 = vmatpush1.msra.mxu0 0.0
        %643 = vmatprep.subr.mxu0 0.0
        %644 = vmatpush1.msra.mxu0 0.0
        %645 = vmatprep.subr.mxu0 0.0
        %646 = vmatpush1.msra.mxu0 0.0
        %647 = vmatprep.subr.mxu0 0.0
        %648 = vmatpush1.msra.mxu0 0.0
        %649 = vmatprep.subr.mxu0 0.0
        %650 = vmatpush1.msra.mxu0 0.0
        %651 = vmatprep.subr.mxu0 0.0
        %652 = vmatpush1.msra.mxu0 %v578
        %653 = vmatprep.subr.mxu0 0.0
        %654 = vmatpush1.msra.mxu0 %v577
        %655 = vmatprep.subr.mxu0 0.0
        %656 = vmatpush1.msra.mxu0 %v576
        %657 = vmatprep.subr.mxu0 0.0
        %658 = vmatpush1.msra.mxu0 %v575
        %659 = vmatprep.subr.mxu0 0.0
        %660 = vmatpush1.msra.mxu0 %v574
        %661 = vmatprep.subr.mxu0 0.0
        %662 = vmatpush1.msra.mxu0 %v573
        %663 = vmatprep.subr.mxu0 0.0
        %664 = vmatpush1.msra.mxu0 %v572
        %665 = vmatprep.subr.mxu0 0.0
        %666 = vmatpush1.msra.mxu0 %v571
        %667 = vmatprep.subr.mxu0 0.0
        %668 = vmatpush2.msra.mxu0 0.0
        %669 = vmatprep.subr.mxu0 0.0
        %670 = vmatpush2.msra.mxu0 0.0
        %671 = vmatprep.subr.mxu0 0.0
        %672 = vmatpush2.msra.mxu0 0.0
        %673 = vmatprep.subr.mxu0 0.0
        %674 = vmatpush2.msra.mxu0 0.0
        %675 = vmatprep.subr.mxu0 0.0
        %676 = vmatpush2.msra.mxu0 0.0
        %677 = vmatprep.subr.mxu0 0.0
        %678 = vmatpush2.msra.mxu0 0.0
        %679 = vmatprep.subr.mxu0 0.0
        %680 = vmatpush2.msra.mxu0 0.0
        %681 = vmatprep.subr.mxu0 0.0
        %682 = vmatpush2.msra.mxu0 0.0
        %683 = vmatprep.subr.mxu0 0.0
        %684 = vmatpush2.msra.mxu0 0.0
        %685 = vmatprep.subr.mxu0 0.0
        %686 = vmatpush2.msra.mxu0 0.0
        %687 = vmatprep.subr.mxu0 0.0
        %688 = vmatpush2.msra.mxu0 0.0
        %689 = vmatprep.subr.mxu0 0.0
        %690 = vmatpush2.msra.mxu0 0.0
        %691 = vmatprep.subr.mxu0 0.0
        %692 = vmatpush2.msra.mxu0 0.0
        %693 = vmatprep.subr.mxu0 0.0
        %694 = vmatpush2.msra.mxu0 0.0
        %695 = vmatprep.subr.mxu0 0.0
        %696 = vmatpush2.msra.mxu0 0.0
        %697 = vmatprep.subr.mxu0 0.0
        %698 = vmatpush2.msra.mxu0 0.0
        %699 = vmatprep.mubr.f32.mxu0 0.0
        %700 = vmatmul.mubr.f32.gmra.mxu0 %v588
        %v701 = vpop.f32.mrf.mxu0
        %v702 = vadd.f32 %v584, %v701
        %v703 = vpop.f32.mrf.mxu0
        %704 = vmatprep.mubr.f32.mxu0 0.0
        %705 = vmatmul.mubr.f32.gmra.mxu0 %v591
        %v706 = vpop.f32.mrf.mxu0
        %v707 = vadd.f32 %v584, %v706
        %v708 = vpop.f32.mrf.mxu0
        %709 = vmatprep.mubr.f32.mxu0 0.0
        %710 = vmatmul.mubr.f32.gmra.mxu0 %v594
        %v711 = vpop.f32.mrf.mxu0
        %v712 = vadd.f32 %v584, %v711
        %v713 = vpop.f32.mrf.mxu0
        %714 = vmatprep.mubr.f32.mxu0 0.0
        %715 = vmatmul.mubr.f32.gmra.mxu0 %v597
        %v716 = vpop.f32.mrf.mxu0
        %v717 = vadd.f32 %v584, %v716
        %v718 = vpop.f32.mrf.mxu0
        %719 = vmatprep.mubr.f32.mxu0 0.0
        %720 = vmatmul.mubr.f32.gmra.mxu0 %v600
        %v721 = vpop.f32.mrf.mxu0
        %v722 = vadd.f32 %v584, %v721
        %v723 = vpop.f32.mrf.mxu0
        %724 = vmatprep.mubr.f32.mxu0 0.0
        %725 = vmatmul.mubr.f32.gmra.mxu0 %v603
        %v726 = vpop.f32.mrf.mxu0
        %v727 = vadd.f32 %v584, %v726
        %v728 = vpop.f32.mrf.mxu0
        %729 = vmatprep.mubr.f32.mxu0 0.0
        %730 = vmatmul.mubr.f32.gmra.mxu0 %v606
        %v731 = vpop.f32.mrf.mxu0
        %v732 = vadd.f32 %v584, %v731
        %v733 = vpop.f32.mrf.mxu0
        %734 = vmatprep.mubr.f32.mxu0 0.0
        %735 = vmatmul.mubr.f32.gmra.mxu0 %v609
        %v736 = vpop.f32.mrf.mxu0
        %v737 = vadd.f32 %v584, %v736
        %v738 = vpop.f32.mrf.mxu0
        %739 = vmatprep.mubr.f32.mxu0 0.0
        %740 = vmatmul.mubr.f32.gmra.mxu0 %v612
        %v741 = vpop.f32.mrf.mxu0
        %v742 = vadd.f32 %v584, %v741
        %v743 = vpop.f32.mrf.mxu0
        %744 = vmatprep.mubr.f32.mxu0 0.0
        %745 = vmatmul.mubr.f32.gmra.mxu0 %v615
        %v746 = vpop.f32.mrf.mxu0
        %v747 = vadd.f32 %v584, %v746
        %v748 = vpop.f32.mrf.mxu0
        %749 = vmatprep.mubr.f32.mxu0 0.0
        %750 = vmatmul.mubr.f32.gmra.mxu0 %v618
        %v751 = vpop.f32.mrf.mxu0
        %v752 = vadd.f32 %v584, %v751
        %v753 = vpop.f32.mrf.mxu0
        %754 = vmatprep.mubr.f32.mxu0 0.0
        %755 = vmatmul.mubr.f32.gmra.mxu0 %v621
        %v756 = vpop.f32.mrf.mxu0
        %v757 = vadd.f32 %v584, %v756
        %v758 = vpop.f32.mrf.mxu0
        %759 = vmatprep.mubr.f32.mxu0 0.0
        %760 = vmatmul.mubr.f32.gmra.mxu0 %v624
        %v761 = vpop.f32.mrf.mxu0
        %v762 = vadd.f32 %v584, %v761
        %v763 = vpop.f32.mrf.mxu0
        %764 = vmatprep.mubr.f32.mxu0 0.0
        %765 = vmatmul.mubr.f32.gmra.mxu0 %v627
        %v766 = vpop.f32.mrf.mxu0
        %v767 = vadd.f32 %v584, %v766
        %v768 = vpop.f32.mrf.mxu0
        %769 = vmatprep.mubr.f32.mxu0 0.0
        %770 = vmatmul.mubr.f32.gmra.mxu0 %v630
        %v771 = vpop.f32.mrf.mxu0
        %v772 = vadd.f32 %v584, %v771
        %v773 = vpop.f32.mrf.mxu0
        %774 = vmatprep.mubr.f32.mxu0 0.0
        %775 = vmatmul.mubr.f32.gmra.mxu0 %v633
        %v776 = vpop.f32.mrf.mxu0
        %v777 = vadd.f32 %v584, %v776
        %v778 = vpop.f32.mrf.mxu0
        %779 = vdwg.mxu0
        %v780 = vmax.f32 %v702, 0.0
        %v781 = vmax.f32 %v707, 0.0
        %v782 = vmax.f32 %v712, 0.0
        %v783 = vmax.f32 %v717, 0.0
        %v784 = vmax.f32 %v722, 0.0
        %v785 = vmax.f32 %v727, 0.0
        %v786 = vmax.f32 %v732, 0.0
        %v787 = vmax.f32 %v737, 0.0
        %v788 = vmax.f32 %v742, 0.0
        %v789 = vmax.f32 %v747, 0.0
        %v790 = vmax.f32 %v752, 0.0
        %v791 = vmax.f32 %v757, 0.0
        %v792 = vmax.f32 %v762, 0.0
        %v793 = vmax.f32 %v767, 0.0
        %v794 = vmax.f32 %v772, 0.0
        %v795 = vmax.f32 %v777, 0.0
        %v796 = vld [vmem:[%s5] sm:$0xff]
        %v797 = vld [vmem:[%s5 + $0x8] sm:$0xff]
        %v798 = vld [vmem:[%s5 + $0x10] sm:$0xff]
        %v799 = vld [vmem:[%s5 + $0x18] sm:$0xff]
        %v800 = vld [vmem:[%s5 + $0x20] sm:$0xff]
        %v801 = vld [vmem:[%s5 + $0x28] sm:$0xff]
        %v802 = vld [vmem:[%s5 + $0x30] sm:$0xff]
        %v803 = vld [vmem:[%s5 + $0x38] sm:$0xff]
        %v804 = vld [vmem:[%s6] sm:$0x1]
        %v806 = vlaneseq
        %v807 = vshrl.u32 %v806, 7
        %v808 = vsub.s32 0, %v807
        %v809 = vrot.slane %v804, %v808
        %v812 = vsel %vm586, %v780, 0
        %v815 = vsel %vm586, %v781, 0
        %v818 = vsel %vm586, %v782, 0
        %v821 = vsel %vm586, %v783, 0
        %v824 = vsel %vm586, %v784, 0
        %v827 = vsel %vm586, %v785, 0
        %v830 = vsel %vm586, %v786, 0
        %v833 = vsel %vm586, %v787, 0
        %v836 = vsel %vm586, %v788, 0
        %v839 = vsel %vm586, %v789, 0
        %v842 = vsel %vm586, %v790, 0
        %v845 = vsel %vm586, %v791, 0
        %v848 = vsel %vm586, %v792, 0
        %v851 = vsel %vm586, %v793, 0
        %v854 = vsel %vm586, %v794, 0
        %v857 = vsel %vm586, %v795, 0
        %859 = vmatprep.subr.mxu0 0.0
        %860 = vmatpush1.msra.mxu0 0.0
        %861 = vmatprep.subr.mxu0 0.0
        %862 = vmatpush1.msra.mxu0 0.0
        %863 = vmatprep.subr.mxu0 0.0
        %864 = vmatpush1.msra.mxu0 0.0
        %865 = vmatprep.subr.mxu0 0.0
        %866 = vmatpush1.msra.mxu0 0.0
        %867 = vmatprep.subr.mxu0 0.0
        %868 = vmatpush1.msra.mxu0 0.0
        %869 = vmatprep.subr.mxu0 0.0
        %870 = vmatpush1.msra.mxu0 0.0
        %871 = vmatprep.subr.mxu0 0.0
        %872 = vmatpush1.msra.mxu0 0.0
        %873 = vmatprep.subr.mxu0 0.0
        %874 = vmatpush1.msra.mxu0 0.0
        %875 = vmatprep.subr.mxu0 0.0
        %876 = vmatpush1.msra.mxu0 %v803
        %877 = vmatprep.subr.mxu0 0.0
        %878 = vmatpush1.msra.mxu0 %v802
        %879 = vmatprep.subr.mxu0 0.0
        %880 = vmatpush1.msra.mxu0 %v801
        %881 = vmatprep.subr.mxu0 0.0
        %882 = vmatpush1.msra.mxu0 %v800
        %883 = vmatprep.subr.mxu0 0.0
        %884 = vmatpush1.msra.mxu0 %v799
        %885 = vmatprep.subr.mxu0 0.0
        %886 = vmatpush1.msra.mxu0 %v798
        %887 = vmatprep.subr.mxu0 0.0
        %888 = vmatpush1.msra.mxu0 %v797
        %889 = vmatprep.subr.mxu0 0.0
        %890 = vmatpush1.msra.mxu0 %v796
        %891 = vmatprep.subr.mxu0 0.0
        %892 = vmatpush2.msra.mxu0 0.0
        %893 = vmatprep.subr.mxu0 0.0
        %894 = vmatpush2.msra.mxu0 0.0
        %895 = vmatprep.subr.mxu0 0.0
        %896 = vmatpush2.msra.mxu0 0.0
        %897 = vmatprep.subr.mxu0 0.0
        %898 = vmatpush2.msra.mxu0 0.0
        %899 = vmatprep.subr.mxu0 0.0
        %900 = vmatpush2.msra.mxu0 0.0
        %901 = vmatprep.subr.mxu0 0.0
        %902 = vmatpush2.msra.mxu0 0.0
        %903 = vmatprep.subr.mxu0 0.0
        %904 = vmatpush2.msra.mxu0 0.0
        %905 = vmatprep.subr.mxu0 0.0
        %906 = vmatpush2.msra.mxu0 0.0
        %907 = vmatprep.subr.mxu0 0.0
        %908 = vmatpush2.msra.mxu0 0.0
        %909 = vmatprep.subr.mxu0 0.0
        %910 = vmatpush2.msra.mxu0 0.0
        %911 = vmatprep.subr.mxu0 0.0
        %912 = vmatpush2.msra.mxu0 0.0
        %913 = vmatprep.subr.mxu0 0.0
        %914 = vmatpush2.msra.mxu0 0.0
        %915 = vmatprep.subr.mxu0 0.0
        %916 = vmatpush2.msra.mxu0 0.0
        %917 = vmatprep.subr.mxu0 0.0
        %918 = vmatpush2.msra.mxu0 0.0
        %919 = vmatprep.subr.mxu0 0.0
        %920 = vmatpush2.msra.mxu0 0.0
        %921 = vmatprep.subr.mxu0 0.0
        %922 = vmatpush2.msra.mxu0 0.0
        %923 = vmatprep.mubr.f32.mxu0 0.0
        %924 = vmatmul.mubr.f32.gmra.mxu0 %v812
        %v925 = vpop.f32.mrf.mxu0
        %v926 = vadd.f32 %v809, %v925
        %v927 = vpop.f32.mrf.mxu0
        %928 = vmatprep.mubr.f32.mxu0 0.0
        %929 = vmatmul.mubr.f32.gmra.mxu0 %v815
        %v930 = vpop.f32.mrf.mxu0
        %v931 = vadd.f32 %v809, %v930
        %v932 = vpop.f32.mrf.mxu0
        %933 = vmatprep.mubr.f32.mxu0 0.0
        %934 = vmatmul.mubr.f32.gmra.mxu0 %v818
        %v935 = vpop.f32.mrf.mxu0
        %v936 = vadd.f32 %v809, %v935
        %v937 = vpop.f32.mrf.mxu0
        %938 = vmatprep.mubr.f32.mxu0 0.0
        %939 = vmatmul.mubr.f32.gmra.mxu0 %v821
        %v940 = vpop.f32.mrf.mxu0
        %v941 = vadd.f32 %v809, %v940
        %v942 = vpop.f32.mrf.mxu0
        %943 = vmatprep.mubr.f32.mxu0 0.0
        %944 = vmatmul.mubr.f32.gmra.mxu0 %v824
        %v945 = vpop.f32.mrf.mxu0
        %v946 = vadd.f32 %v809, %v945
        %v947 = vpop.f32.mrf.mxu0
        %948 = vmatprep.mubr.f32.mxu0 0.0
        %949 = vmatmul.mubr.f32.gmra.mxu0 %v827
        %v950 = vpop.f32.mrf.mxu0
        %v951 = vadd.f32 %v809, %v950
        %v952 = vpop.f32.mrf.mxu0
        %953 = vmatprep.mubr.f32.mxu0 0.0
        %954 = vmatmul.mubr.f32.gmra.mxu0 %v830
        %v955 = vpop.f32.mrf.mxu0
        %v956 = vadd.f32 %v809, %v955
        %v957 = vpop.f32.mrf.mxu0
        %958 = vmatprep.mubr.f32.mxu0 0.0
        %959 = vmatmul.mubr.f32.gmra.mxu0 %v833
        %v960 = vpop.f32.mrf.mxu0
        %v961 = vadd.f32 %v809, %v960
        %v962 = vpop.f32.mrf.mxu0
        %963 = vmatprep.mubr.f32.mxu0 0.0
        %964 = vmatmul.mubr.f32.gmra.mxu0 %v836
        %v965 = vpop.f32.mrf.mxu0
        %v966 = vadd.f32 %v809, %v965
        %v967 = vpop.f32.mrf.mxu0
        %968 = vmatprep.mubr.f32.mxu0 0.0
        %969 = vmatmul.mubr.f32.gmra.mxu0 %v839
        %v970 = vpop.f32.mrf.mxu0
        %v971 = vadd.f32 %v809, %v970
        %v972 = vpop.f32.mrf.mxu0
        %973 = vmatprep.mubr.f32.mxu0 0.0
        %974 = vmatmul.mubr.f32.gmra.mxu0 %v842
        %v975 = vpop.f32.mrf.mxu0
        %v976 = vadd.f32 %v809, %v975
        %v977 = vpop.f32.mrf.mxu0
        %978 = vmatprep.mubr.f32.mxu0 0.0
        %979 = vmatmul.mubr.f32.gmra.mxu0 %v845
        %v980 = vpop.f32.mrf.mxu0
        %v981 = vadd.f32 %v809, %v980
        %v982 = vpop.f32.mrf.mxu0
        %983 = vmatprep.mubr.f32.mxu0 0.0
        %984 = vmatmul.mubr.f32.gmra.mxu0 %v848
        %v985 = vpop.f32.mrf.mxu0
        %v986 = vadd.f32 %v809, %v985
        %v987 = vpop.f32.mrf.mxu0
        %988 = vmatprep.mubr.f32.mxu0 0.0
        %989 = vmatmul.mubr.f32.gmra.mxu0 %v851
        %v990 = vpop.f32.mrf.mxu0
        %v991 = vadd.f32 %v809, %v990
        %v992 = vpop.f32.mrf.mxu0
        %993 = vmatprep.mubr.f32.mxu0 0.0
        %994 = vmatmul.mubr.f32.gmra.mxu0 %v854
        %v995 = vpop.f32.mrf.mxu0
        %v996 = vadd.f32 %v809, %v995
        %v997 = vpop.f32.mrf.mxu0
        %998 = vmatprep.mubr.f32.mxu0 0.0
        %999 = vmatmul.mubr.f32.gmra.mxu0 %v857
        %v1000 = vpop.f32.mrf.mxu0
        %v1001 = vadd.f32 %v809, %v1000
        %v1002 = vpop.f32.mrf.mxu0
        %1003 = vdwg.mxu0
        %v1004 = vmax.f32 %v926, 0.0
        %v1005 = vmax.f32 %v931, 0.0
        %v1006 = vmax.f32 %v936, 0.0
        %v1007 = vmax.f32 %v941, 0.0
        %v1008 = vmax.f32 %v946, 0.0
        %v1009 = vmax.f32 %v951, 0.0
        %v1010 = vmax.f32 %v956, 0.0
        %v1011 = vmax.f32 %v961, 0.0
        %v1012 = vmax.f32 %v966, 0.0
        %v1013 = vmax.f32 %v971, 0.0
        %v1014 = vmax.f32 %v976, 0.0
        %v1015 = vmax.f32 %v981, 0.0
        %v1016 = vmax.f32 %v986, 0.0
        %v1017 = vmax.f32 %v991, 0.0
        %v1018 = vmax.f32 %v996, 0.0
        %v1019 = vmax.f32 %v1001, 0.0
        %v1020 = vld [vmem:[%s7] sm:$0xff]
        %v1021 = vld [vmem:[%s7 + $0x8] sm:$0xff]
        %v1022 = vld [vmem:[%s7 + $0x10] sm:$0xff]
        %v1023 = vld [vmem:[%s7 + $0x18] sm:$0xff]
        %v1024 = vld [vmem:[%s7 + $0x20] sm:$0xff]
        %v1025 = vld [vmem:[%s7 + $0x28] sm:$0xff]
        %v1026 = vld [vmem:[%s7 + $0x30] sm:$0xff]
        %v1027 = vld [vmem:[%s7 + $0x38] sm:$0xff]
        %v1028 = vld [vmem:[%s8] sm:$0x1]
        %v1030 = vlaneseq
        %v1031 = vshrl.u32 %v1030, 7
        %v1032 = vsub.s32 0, %v1031
        %v1033 = vrot.slane %v1028, %v1032
        %v1036 = vsel %vm586, %v1004, 0
        %v1039 = vsel %vm586, %v1005, 0
        %v1042 = vsel %vm586, %v1006, 0
        %v1045 = vsel %vm586, %v1007, 0
        %v1048 = vsel %vm586, %v1008, 0
        %v1051 = vsel %vm586, %v1009, 0
        %v1054 = vsel %vm586, %v1010, 0
        %v1057 = vsel %vm586, %v1011, 0
        %v1060 = vsel %vm586, %v1012, 0
        %v1063 = vsel %vm586, %v1013, 0
        %v1066 = vsel %vm586, %v1014, 0
        %v1069 = vsel %vm586, %v1015, 0
        %v1072 = vsel %vm586, %v1016, 0
        %v1075 = vsel %vm586, %v1017, 0
        %v1078 = vsel %vm586, %v1018, 0
        %v1081 = vsel %vm586, %v1019, 0
        %1083 = vmatprep.subr.mxu0 0.0
        %1084 = vmatpush1.msra.mxu0 0.0
        %1085 = vmatprep.subr.mxu0 0.0
        %1086 = vmatpush1.msra.mxu0 0.0
        %1087 = vmatprep.subr.mxu0 0.0
        %1088 = vmatpush1.msra.mxu0 0.0
        %1089 = vmatprep.subr.mxu0 0.0
        %1090 = vmatpush1.msra.mxu0 0.0
        %1091 = vmatprep.subr.mxu0 0.0
        %1092 = vmatpush1.msra.mxu0 0.0
        %1093 = vmatprep.subr.mxu0 0.0
        %1094 = vmatpush1.msra.mxu0 0.0
        %1095 = vmatprep.subr.mxu0 0.0
        %1096 = vmatpush1.msra.mxu0 0.0
        %1097 = vmatprep.subr.mxu0 0.0
        %1098 = vmatpush1.msra.mxu0 0.0
        %1099 = vmatprep.subr.mxu0 0.0
        %1100 = vmatpush1.msra.mxu0 %v1027
        %1101 = vmatprep.subr.mxu0 0.0
        %1102 = vmatpush1.msra.mxu0 %v1026
        %1103 = vmatprep.subr.mxu0 0.0
        %1104 = vmatpush1.msra.mxu0 %v1025
        %1105 = vmatprep.subr.mxu0 0.0
        %1106 = vmatpush1.msra.mxu0 %v1024
        %1107 = vmatprep.subr.mxu0 0.0
        %1108 = vmatpush1.msra.mxu0 %v1023
        %1109 = vmatprep.subr.mxu0 0.0
        %1110 = vmatpush1.msra.mxu0 %v1022
        %1111 = vmatprep.subr.mxu0 0.0
        %1112 = vmatpush1.msra.mxu0 %v1021
        %1113 = vmatprep.subr.mxu0 0.0
        %1114 = vmatpush1.msra.mxu0 %v1020
        %1115 = vmatprep.subr.mxu0 0.0
        %1116 = vmatpush2.msra.mxu0 0.0
        %1117 = vmatprep.subr.mxu0 0.0
        %1118 = vmatpush2.msra.mxu0 0.0
        %1119 = vmatprep.subr.mxu0 0.0
        %1120 = vmatpush2.msra.mxu0 0.0
        %1121 = vmatprep.subr.mxu0 0.0
        %1122 = vmatpush2.msra.mxu0 0.0
        %1123 = vmatprep.subr.mxu0 0.0
        %1124 = vmatpush2.msra.mxu0 0.0
        %1125 = vmatprep.subr.mxu0 0.0
        %1126 = vmatpush2.msra.mxu0 0.0
        %1127 = vmatprep.subr.mxu0 0.0
        %1128 = vmatpush2.msra.mxu0 0.0
        %1129 = vmatprep.subr.mxu0 0.0
        %1130 = vmatpush2.msra.mxu0 0.0
        %1131 = vmatprep.subr.mxu0 0.0
        %1132 = vmatpush2.msra.mxu0 0.0
        %1133 = vmatprep.subr.mxu0 0.0
        %1134 = vmatpush2.msra.mxu0 0.0
        %1135 = vmatprep.subr.mxu0 0.0
        %1136 = vmatpush2.msra.mxu0 0.0
        %1137 = vmatprep.subr.mxu0 0.0
        %1138 = vmatpush2.msra.mxu0 0.0
        %1139 = vmatprep.subr.mxu0 0.0
        %1140 = vmatpush2.msra.mxu0 0.0
        %1141 = vmatprep.subr.mxu0 0.0
        %1142 = vmatpush2.msra.mxu0 0.0
        %1143 = vmatprep.subr.mxu0 0.0
        %1144 = vmatpush2.msra.mxu0 0.0
        %1145 = vmatprep.subr.mxu0 0.0
        %1146 = vmatpush2.msra.mxu0 0.0
        %1147 = vmatprep.mubr.f32.mxu0 0.0
        %1148 = vmatmul.mubr.f32.gmra.mxu0 %v1036
        %v1149 = vpop.f32.mrf.mxu0
        %v1150 = vadd.f32 %v1033, %v1149
        %v1151 = vpop.f32.mrf.mxu0
        %1152 = vmatprep.mubr.f32.mxu0 0.0
        %1153 = vmatmul.mubr.f32.gmra.mxu0 %v1039
        %v1154 = vpop.f32.mrf.mxu0
        %v1155 = vadd.f32 %v1033, %v1154
        %v1156 = vpop.f32.mrf.mxu0
        %1157 = vmatprep.mubr.f32.mxu0 0.0
        %1158 = vmatmul.mubr.f32.gmra.mxu0 %v1042
        %v1159 = vpop.f32.mrf.mxu0
        %v1160 = vadd.f32 %v1033, %v1159
        %v1161 = vpop.f32.mrf.mxu0
        %1162 = vmatprep.mubr.f32.mxu0 0.0
        %1163 = vmatmul.mubr.f32.gmra.mxu0 %v1045
        %v1164 = vpop.f32.mrf.mxu0
        %v1165 = vadd.f32 %v1033, %v1164
        %v1166 = vpop.f32.mrf.mxu0
        %1167 = vmatprep.mubr.f32.mxu0 0.0
        %1168 = vmatmul.mubr.f32.gmra.mxu0 %v1048
        %v1169 = vpop.f32.mrf.mxu0
        %v1170 = vadd.f32 %v1033, %v1169
        %v1171 = vpop.f32.mrf.mxu0
        %1172 = vmatprep.mubr.f32.mxu0 0.0
        %1173 = vmatmul.mubr.f32.gmra.mxu0 %v1051
        %v1174 = vpop.f32.mrf.mxu0
        %v1175 = vadd.f32 %v1033, %v1174
        %v1176 = vpop.f32.mrf.mxu0
        %1177 = vmatprep.mubr.f32.mxu0 0.0
        %1178 = vmatmul.mubr.f32.gmra.mxu0 %v1054
        %v1179 = vpop.f32.mrf.mxu0
        %v1180 = vadd.f32 %v1033, %v1179
        %v1181 = vpop.f32.mrf.mxu0
        %1182 = vmatprep.mubr.f32.mxu0 0.0
        %1183 = vmatmul.mubr.f32.gmra.mxu0 %v1057
        %v1184 = vpop.f32.mrf.mxu0
        %v1185 = vadd.f32 %v1033, %v1184
        %v1186 = vpop.f32.mrf.mxu0
        %1187 = vmatprep.mubr.f32.mxu0 0.0
        %1188 = vmatmul.mubr.f32.gmra.mxu0 %v1060
        %v1189 = vpop.f32.mrf.mxu0
        %v1190 = vadd.f32 %v1033, %v1189
        %v1191 = vpop.f32.mrf.mxu0
        %1192 = vmatprep.mubr.f32.mxu0 0.0
        %1193 = vmatmul.mubr.f32.gmra.mxu0 %v1063
        %v1194 = vpop.f32.mrf.mxu0
        %v1195 = vadd.f32 %v1033, %v1194
        %v1196 = vpop.f32.mrf.mxu0
        %1197 = vmatprep.mubr.f32.mxu0 0.0
        %1198 = vmatmul.mubr.f32.gmra.mxu0 %v1066
        %v1199 = vpop.f32.mrf.mxu0
        %v1200 = vadd.f32 %v1033, %v1199
        %v1201 = vpop.f32.mrf.mxu0
        %1202 = vmatprep.mubr.f32.mxu0 0.0
        %1203 = vmatmul.mubr.f32.gmra.mxu0 %v1069
        %v1204 = vpop.f32.mrf.mxu0
        %v1205 = vadd.f32 %v1033, %v1204
        %v1206 = vpop.f32.mrf.mxu0
        %1207 = vmatprep.mubr.f32.mxu0 0.0
        %1208 = vmatmul.mubr.f32.gmra.mxu0 %v1072
        %v1209 = vpop.f32.mrf.mxu0
        %v1210 = vadd.f32 %v1033, %v1209
        %v1211 = vpop.f32.mrf.mxu0
        %1212 = vmatprep.mubr.f32.mxu0 0.0
        %1213 = vmatmul.mubr.f32.gmra.mxu0 %v1075
        %v1214 = vpop.f32.mrf.mxu0
        %v1215 = vadd.f32 %v1033, %v1214
        %v1216 = vpop.f32.mrf.mxu0
        %1217 = vmatprep.mubr.f32.mxu0 0.0
        %1218 = vmatmul.mubr.f32.gmra.mxu0 %v1078
        %v1219 = vpop.f32.mrf.mxu0
        %v1220 = vadd.f32 %v1033, %v1219
        %v1221 = vpop.f32.mrf.mxu0
        %1222 = vmatprep.mubr.f32.mxu0 0.0
        %1223 = vmatmul.mubr.f32.gmra.mxu0 %v1081
        %v1224 = vpop.f32.mrf.mxu0
        %v1225 = vadd.f32 %v1033, %v1224
        %v1226 = vpop.f32.mrf.mxu0
        %1227 = vdwg.mxu0
        %1228 = vst [vmem:[%s326] sm:$0xff] %v1150
        %1229 = vst [vmem:[%s326 + $0x8] sm:$0xff] %v1155
        %1230 = vst [vmem:[%s326 + $0x10] sm:$0xff] %v1160
        %1231 = vst [vmem:[%s326 + $0x18] sm:$0xff] %v1165
        %1232 = vst [vmem:[%s326 + $0x20] sm:$0xff] %v1170
        %1233 = vst [vmem:[%s326 + $0x28] sm:$0xff] %v1175
        %1234 = vst [vmem:[%s326 + $0x30] sm:$0xff] %v1180
        %1235 = vst [vmem:[%s326 + $0x38] sm:$0xff] %v1185
        %1236 = vst [vmem:[%s326 + $0x40] sm:$0xff] %v1190
        %1237 = vst [vmem:[%s326 + $0x48] sm:$0xff] %v1195
        %1238 = vst [vmem:[%s326 + $0x50] sm:$0xff] %v1200
        %1239 = vst [vmem:[%s326 + $0x58] sm:$0xff] %v1205
        %1240 = vst [vmem:[%s326 + $0x60] sm:$0xff] %v1210
        %1241 = vst [vmem:[%s326 + $0x68] sm:$0xff] %v1215
        %1242 = vst [vmem:[%s326 + $0x70] sm:$0xff] %v1220
        %1243 = vst [vmem:[%s326 + $0x78] sm:$0xff] %v1225
        %s1244 = sand.u32 %s225, 1
        %s1245 = scalar_lea.sflag [#allocation3], %s1244
        %s1246 = sand.u32 %s225, 1
        %s1247 = smul.addr %s1246, 128
        %s1248 = scalar_lea.vmem [#allocation2], %s1247
        // Predicated region
        $region57: #{tpu_custom_call.1} parent=55 // pred_check
          %p1249 = pneg %p235
        $region58: #{tpu_custom_call.1} parent=55 // pred_check_branch
          %1251 = sbr.rel (%p1249) target = $region60
        $region59: #{tpu_custom_call.1} parent=55 // pred_region
          %s1252 = smul.u32 16, %s23
          %s1254 = ssub.s32 2048, 2048
          %1255 = vsyncadd %s1245, %s1254
          %s1256 = smul.addr %s1252, 128
          %s1257 = scalar_lea.hbm %s9, %s1256
          %s1258 = sshll.u32 %s1248, 4
          %s1259 = int_to_ptr.vmem [resolvable:$true] %s1258
          %1264 = dma.vmem_to_hbm [thread:$0]  %s1259, 2048, %s1257, %s1245, 128, 128, 8
        $region60: #{tpu_custom_call.1} parent=55 // pred_fallthru
          _
      $region56: #{tpu_custom_call.1} parent=5 // pred_fallthru
        _
      %p1265 = scmp.le.s32.totalorder 2, %s18
      // Predicated region
      $region61: #{tpu_custom_call.1} parent=5 // pred_check
        %p1266 = pneg %p1265
      $region62: #{tpu_custom_call.1} parent=5 // pred_check_branch
        %1268 = sbr.rel (%p1266) target = $region64
      $region63: #{tpu_custom_call.1} parent=5 // pred_region
        %s1269 = ssub.s32 %s18, 2
        // Predicated region
        $region65: #{tpu_custom_call.1} parent=63 // pred_check
          %p1270 = pneg %p241
        $region66: #{tpu_custom_call.1} parent=63 // pred_check_branch
          %1272 = sbr.rel (%p1270) target = $region68
        $region67: #{tpu_custom_call.1} parent=63 // pred_region
          %s1273 = sand.u32 %s226, 1
          %s1274 = scalar_lea.sflag [#allocation3], %s1273
          %s1275 = sand.u32 %s226, 1
          %s1276 = smul.addr %s1275, 128
          %s1277 = scalar_lea.vmem [#allocation2], %s1276
          %1278 = dma.done %s1274, 2048
        $region68: #{tpu_custom_call.1} parent=63 // pred_fallthru
          _
      $region64: #{tpu_custom_call.1} parent=5 // pred_fallthru
        _
    $region6: #{tpu_custom_call.1} parent=1 // loop_footer
      %s22 = sadd.s32 1, %s18
    $region7: #{tpu_custom_call.1} parent=1 // loop_footer_branch
      %17 = sbr.rel target = $region3
    $region8: #{tpu_custom_call.1} parent=1 // loop_exit
      _
    %1279 = vsyncpa [#allocation3], 1
    %s1280 = scalar_lea.sflag [#allocation3], 1
    %1281 = vsyncpa %s1280, 1

</llo_original>
